<compile_context>
chip_gen: v5e
topology: v5e:2x2
jax: 0.10.0
libtpu: 0.0.40
codegen_flags: <defaults>
</compile_context>

<pallas_src>
import functools

import jax
import jax.numpy as jnp
from jax.experimental import pallas as pl
from jax.experimental.pallas import tpu as pltpu


# ---------------------------------------------------------------------------
# Kernels
# ---------------------------------------------------------------------------

def _ln_qkv_kernel(x_ref, g_ref, beta_ref, wqkv_ref, o_ref, *, eps, matmul_dtype):
    """LayerNorm over the last dim followed by the bias-free QKV projection."""
    x = x_ref[...].astype(jnp.float32)                            # (TM, E)

    # Two-pass mean / variance (matches torch LayerNorm, avoids cancellation).
    mean = jnp.mean(x, axis=-1, keepdims=True)
    xc = x - mean
    var = jnp.mean(xc * xc, axis=-1, keepdims=True)
    # Fused scale: s = gamma * rsqrt(var + eps).
    s = g_ref[...].astype(jnp.float32) * jax.lax.rsqrt(var + eps)
    xn = xc * s + beta_ref[...].astype(jnp.float32)               # (TM, E)

    lhs = xn if matmul_dtype is None else xn.astype(matmul_dtype)
    rhs = wqkv_ref[...]
    if matmul_dtype is not None:
        rhs = rhs.astype(matmul_dtype)
    qkv = jnp.dot(lhs, rhs, preferred_element_type=jnp.float32)   # (TM, 3*inner)
    o_ref[...] = qkv.astype(o_ref.dtype)


def _attn_kernel(qkv_ref, o_ref, *, heads, dim_head, inner, scale, s_valid,
                 matmul_dtype):
    """Softmax attention for one batch element, all heads in-kernel.

    qkv_ref: (1, Sp, 3*inner) laid out as [q(h0..hH-1) | k(...) | v(...)].
    o_ref:   (1, Sp, inner)  already in 'n (h d)' layout for the out projection.
    """
    qkv = qkv_ref[0]                                              # (Sp, 3*inner)
    sp = qkv.shape[0]
    pv_dtype = jnp.float32 if matmul_dtype is None else matmul_dtype

    mask = None
    if s_valid < sp:
        key_ids = jax.lax.broadcasted_iota(jnp.int32, (sp, sp), 1)
        mask = key_ids < s_valid                                  # mask padded keys

    outs = []
    # TODO(synk): for long sequences, tile over KV blocks with an online softmax
    # (flash-style); for large heads*dim_head, move heads to a grid axis with
    # G*dim_head % 128 == 0 so the per-group blocks are lane-dense.
    for h in range(heads):
        q = qkv[:, h * dim_head:(h + 1) * dim_head]               # (Sp, D)
        k = qkv[:, inner + h * dim_head: inner + (h + 1) * dim_head]
        v = qkv[:, 2 * inner + h * dim_head: 2 * inner + (h + 1) * dim_head]
        if matmul_dtype is not None:
            q = q.astype(matmul_dtype)
            k = k.astype(matmul_dtype)

        # Contract on the feature dim directly (no k.T relayout before the MXU).
        sc = jax.lax.dot_general(
            q, k, (((1,), (1,)), ((), ())),
            preferred_element_type=jnp.float32) * scale           # (Sp, Sp)
        if mask is not None:
            sc = jnp.where(mask, sc, -jnp.inf)

        m = jnp.max(sc, axis=-1, keepdims=True)
        p = jnp.exp(sc - m)
        l = jnp.sum(p, axis=-1, keepdims=True)
        # Dropout(p=0.0) on the attention weights is the identity -> omitted.

        o = jnp.dot(p.astype(pv_dtype), v.astype(pv_dtype),
                    preferred_element_type=jnp.float32)           # (Sp, D)
        # Deferred normalization: EUP reciprocal + one Newton step (near-exact).
        inv_l = pl.reciprocal(l, approx=True)
        inv_l = inv_l * (2.0 - l * inv_l)
        outs.append(o * inv_l)

    # One lane-dense store of the full (Sp, inner) slab.
    o_ref[0] = jnp.concatenate(outs, axis=-1).astype(o_ref.dtype)


def _out_proj_kernel(a_ref, w_ref, b_ref, o_ref, *, matmul_dtype):
    a = a_ref[...]
    w = w_ref[...]
    if matmul_dtype is not None:
        a = a.astype(matmul_dtype)
        w = w.astype(matmul_dtype)
    y = (jnp.dot(a, w, preferred_element_type=jnp.float32)
         + b_ref[...].astype(jnp.float32))
    o_ref[...] = y.astype(o_ref.dtype)


# ---------------------------------------------------------------------------
# Wrapper helpers
# ---------------------------------------------------------------------------

@functools.lru_cache(maxsize=None)
def _single_buffer_supported():
    """Explicit capability probe: does this build lower pipeline_mode=Buffered(1)?

    One tiny kernel is lowered (not run) once; unrelated errors in the real
    forward are never swallowed by this check.
    """
    if not hasattr(pl, "Buffered"):
        return False

    def _probe(x_ref, o_ref):
        o_ref[...] = x_ref[...]

    try:
        probe = pl.pallas_call(
            _probe,
            out_shape=jax.ShapeDtypeStruct((8, 128), jnp.float32),
            grid=(1,),
            in_specs=[pl.BlockSpec((8, 128), lambda i: (0, 0),
                                   pipeline_mode=pl.Buffered(1))],
            out_specs=pl.BlockSpec((8, 128), lambda i: (0, 0)),
        )
        jax.jit(probe).lower(jax.ShapeDtypeStruct((8, 128), jnp.float32))
        return True
    except Exception:
        return False


def _const_spec(block_shape):
    """BlockSpec for an operand whose block index never changes across the grid."""
    index_map = lambda *_: (0,) * len(block_shape)
    if _single_buffer_supported():
        return pl.BlockSpec(block_shape, index_map, pipeline_mode=pl.Buffered(1))
    return pl.BlockSpec(block_shape, index_map)


def _pick_row_tile(n_tokens, max_tile):
    """Largest multiple of 8 that divides n_tokens and is <= max_tile."""
    t = min(max_tile, n_tokens)
    t -= t % 8
    t = max(t, 8)
    while n_tokens % t:
        t -= 8
    return t


def _cparams(vmem_limit_bytes):
    kw = dict(dimension_semantics=("parallel",))
    if vmem_limit_bytes is not None:
        kw["vmem_limit_bytes"] = int(vmem_limit_bytes)
    return pltpu.CompilerParams(**kw)


# ---------------------------------------------------------------------------
# Forward
# ---------------------------------------------------------------------------

def mhsa_pallas(x, gamma, beta, w_qkv, w_out=None, b_out=None, *, heads, dim_head,
                eps=1e-5, tm=256, matmul_dtype=jnp.bfloat16, vmem_limit_bytes=None):
    """x: (B, S, E). Weights stored as (in, out): w_qkv (E, 3*H*D), w_out (H*D, E).

    matmul_dtype: dtype of MXU operands (accumulation stays f32); bf16 is
    MXU-native on v5e/v6e/v7x. None keeps full-precision operands.
    """
    B, S, E = x.shape
    inner = heads * dim_head
    scale = float(dim_head) ** -0.5

    # Pad seq to a multiple of 8 (sublane alignment); padded keys are masked in
    # the attention kernel and padded rows sliced off at the very end.
    Sp = ((S + 7) // 8) * 8
    xp = x if Sp == S else jnp.pad(x, ((0, 0), (0, Sp - S), (0, 0)))
    Nt = B * Sp
    tm_eff = _pick_row_tile(Nt, tm)
    n_tiles = Nt // tm_eff

    # bf16 inter-kernel intermediates halve their HBM round-trip traffic.
    inter_dtype = x.dtype if matmul_dtype is None else matmul_dtype

    x2 = xp.reshape(Nt, E)                      # metadata-only reshape
    gamma2 = gamma.reshape(1, E)
    beta2 = beta.reshape(1, E)
    cp = _cparams(vmem_limit_bytes)

    # ---- Kernel 1: fused LayerNorm + QKV projection -------------------------
    # TODO(synk): for large E/inner (v7x 64 MiB VMEM), add an output-column grid
    # axis so the weight block is (E, tn) rather than (E, 3*inner).
    qkv = pl.pallas_call(
        functools.partial(_ln_qkv_kernel, eps=eps, matmul_dtype=matmul_dtype),
        out_shape=jax.ShapeDtypeStruct((Nt, 3 * inner), inter_dtype),
        grid_spec=pltpu.PrefetchScalarGridSpec(
            num_scalar_prefetch=0,
            grid=(n_tiles,),
            in_specs=[
                pl.BlockSpec((tm_eff, E), lambda i: (i, 0)),      # x tile
                _const_spec((1, E)),                              # gamma
                _const_spec((1, E)),                              # beta
                _const_spec((E, 3 * inner)),                      # W_qkv
            ],
            out_specs=pl.BlockSpec((tm_eff, 3 * inner), lambda i: (i, 0)),
        ),
        compiler_params=cp,
    )(x2, gamma2, beta2, w_qkv)

    # Free reshape (no transpose, no copy): (Nt, 3*inner) -> (B, Sp, 3*inner).
    qkv3 = qkv.reshape(B, Sp, 3 * inner)

    # ---- Kernel 2: per-batch attention (all heads in-kernel) -----------------
    attn = pl.pallas_call(
        functools.partial(_attn_kernel, heads=heads, dim_head=dim_head,
                          inner=inner, scale=scale, s_valid=S,
                          matmul_dtype=matmul_dtype),
        out_shape=jax.ShapeDtypeStruct((B, Sp, inner), inter_dtype),
        grid_spec=pltpu.PrefetchScalarGridSpec(
            num_scalar_prefetch=0,
            grid=(B,),
            in_specs=[pl.BlockSpec((1, Sp, 3 * inner), lambda b: (b, 0, 0))],
            out_specs=pl.BlockSpec((1, Sp, inner), lambda b: (b, 0, 0)),
        ),
        compiler_params=cp,
    )(qkv3)

    project_out = not (heads == 1 and dim_head == E)
    if not project_out:                      # to_out is nn.Identity()
        out = attn if Sp == S else attn[:, :S]
        return out.astype(x.dtype)

    a2 = attn.reshape(Nt, inner)                  # free reshape, already 'n (h d)'
    b_out2 = b_out.reshape(1, E)

    # ---- Kernel 3: output projection + bias ----------------------------------
    y = pl.pallas_call(
        functools.partial(_out_proj_kernel, matmul_dtype=matmul_dtype),
        out_shape=jax.ShapeDtypeStruct((Nt, E), x.dtype),
        grid_spec=pltpu.PrefetchScalarGridSpec(
            num_scalar_prefetch=0,
            grid=(n_tiles,),
            in_specs=[
                pl.BlockSpec((tm_eff, inner), lambda i: (i, 0)),  # attn out tile
                _const_spec((inner, E)),                          # W_out
                _const_spec((1, E)),                              # b_out
            ],
            out_specs=pl.BlockSpec((tm_eff, E), lambda i: (i, 0)),
        ),
        compiler_params=cp,
    )(a2, w_out, b_out2)

    y = y.reshape(B, Sp, E)
    return y if Sp == S else y[:, :S]


# ---------------------------------------------------------------------------
# Pure-JAX reference (mirrors the PyTorch module)
# ---------------------------------------------------------------------------

def mhsa_ref(x, gamma, beta, w_qkv, w_out, b_out, *, heads, dim_head, eps=1e-5):
    B, S, E = x.shape
    xf = x.astype(jnp.float32)
    mean = jnp.mean(xf, axis=-1, keepdims=True)
    var = jnp.mean((xf - mean) ** 2, axis=-1, keepdims=True)
    xn = (xf - mean) * jax.lax.rsqrt(var + eps) * gamma + beta
    qkv = xn @ w_qkv
    q, k, v = jnp.split(qkv, 3, axis=-1)

    def split_heads(t):
        return t.reshape(B, S, heads, dim_head).transpose(0, 2, 1, 3)

    q, k, v = map(split_heads, (q, k, v))
    dots = jnp.einsum("bhqd,bhkd->bhqk", q, k) * (float(dim_head) ** -0.5)
    attn = jax.nn.softmax(dots, axis=-1)
    o = jnp.einsum("bhqk,bhkd->bhqd", attn, v)
    o = o.transpose(0, 2, 1, 3).reshape(B, S, heads * dim_head)
    if not (heads == 1 and dim_head == E):
        o = o @ w_out + b_out
    return o.astype(x.dtype)


if __name__ == "__main__":
    # Small shapes consistent with the module: batch=2, seq=8, embed_dim=32,
    # heads=4, dim_head=16 -> inner_dim=64, project_out=True.
    B, S, E, H, D = 2, 8, 32, 4, 16
    inner = H * D

    key = jax.random.PRNGKey(0)
    kx, kg, kb, kqkv, kwo, kbo = jax.random.split(key, 6)

    x = jax.random.normal(kx, (B, S, E), dtype=jnp.float32)
    gamma = jnp.ones((E,), jnp.float32) + 0.01 * jax.random.normal(kg, (E,))
    beta = 0.01 * jax.random.normal(kb, (E,))
    # Weights stored as (in, out), so the kernels compute y = x @ W (+ b).
    w_qkv = jax.random.normal(kqkv, (E, 3 * inner), jnp.float32) / jnp.sqrt(E)
    w_out = jax.random.normal(kwo, (inner, E), jnp.float32) / jnp.sqrt(inner)
    b_out = 0.01 * jax.random.normal(kbo, (E,))

    ref = mhsa_ref(x, gamma, beta, w_qkv, w_out, b_out, heads=H, dim_head=D)

    # Full-precision operand path: tight tolerance.
    out_f32 = mhsa_pallas(x, gamma, beta, w_qkv, w_out, b_out,
                          heads=H, dim_head=D, matmul_dtype=None)
    out_f32 = jax.block_until_ready(out_f32)
    assert out_f32.shape == (B, S, E)
    assert jnp.allclose(out_f32, ref, atol=5e-4, rtol=5e-4), \
        float(jnp.max(jnp.abs(out_f32 - ref)))

    # Default bf16-MXU path: looser tolerance (bf16 operands, f32 accumulation).
    out_bf16 = mhsa_pallas(x, gamma, beta, w_qkv, w_out, b_out,
                           heads=H, dim_head=D)
    out_bf16 = jax.block_until_ready(out_bf16)
    assert out_bf16.shape == (B, S, E)
    assert jnp.allclose(out_bf16, ref, atol=5e-2, rtol=5e-2), \
        float(jnp.max(jnp.abs(out_bf16 - ref)))

    print("KERNEL_OK")
</pallas_src>

<mosaic_0001>
module attributes {stable_mosaic.version = 11 : i64} {
  func.func @_ln_qkv_kernel(%arg0: i32, %arg1: memref<16x32xf32, #tpu.memory_space<vmem>>, %arg2: memref<1x32xf32, #tpu.memory_space<vmem>>, %arg3: memref<1x32xf32, #tpu.memory_space<vmem>>, %arg4: memref<32x192xf32, #tpu.memory_space<vmem>>, %arg5: memref<16x192xf32, #tpu.memory_space<vmem>>) attributes {dimension_semantics = [#tpu.dimension_semantics<parallel>], iteration_bounds = array<i64: 1>, scalar_prefetch = 0 : i64, scratch_operands = 0 : i64, tpu.core_type = #tpu.core_type<tc>, window_params = [{transform_indices = @transform_0, window_bounds = array<i64: 16, 32>}, {pipeline_mode = #tpu.pipeline_mode<synchronous>, transform_indices = @transform_1, window_bounds = array<i64: 1, 32>}, {pipeline_mode = #tpu.pipeline_mode<synchronous>, transform_indices = @transform_2, window_bounds = array<i64: 1, 32>}, {pipeline_mode = #tpu.pipeline_mode<synchronous>, transform_indices = @transform_3, window_bounds = array<i64: 32, 192>}, {transform_indices = @transform_4, window_bounds = array<i64: 16, 192>}]} {
    %c0 = arith.constant 0 : index
    %c0_0 = arith.constant 0 : index
    %0 = vector.load %arg1[%c0, %c0_0] : memref<16x32xf32, #tpu.memory_space<vmem>>, vector<16x32xf32>
    %cst = arith.constant dense<0.000000e+00> : vector<16xf32>
    %1 = vector.multi_reduction <add>, %0, %cst [1] : vector<16x32xf32> to vector<16xf32>
    %2 = vector.shape_cast %1 : vector<16xf32> to vector<16x1xf32>
    %cst_1 = arith.constant 3.200000e+01 : f32
    %3 = vector.broadcast %cst_1 : f32 to vector<16x1xf32>
    %4 = arith.divf %2, %3 : vector<16x1xf32>
    %5 = vector.broadcast %4 : vector<16x1xf32> to vector<16x32xf32>
    %6 = arith.subf %0, %5 : vector<16x32xf32>
    %7 = arith.mulf %6, %6 : vector<16x32xf32>
    %cst_2 = arith.constant dense<0.000000e+00> : vector<16xf32>
    %8 = vector.multi_reduction <add>, %7, %cst_2 [1] : vector<16x32xf32> to vector<16xf32>
    %9 = vector.shape_cast %8 : vector<16xf32> to vector<16x1xf32>
    %cst_3 = arith.constant 3.200000e+01 : f32
    %10 = vector.broadcast %cst_3 : f32 to vector<16x1xf32>
    %11 = arith.divf %9, %10 : vector<16x1xf32>
    %c0_4 = arith.constant 0 : index
    %c0_5 = arith.constant 0 : index
    %12 = vector.load %arg2[%c0_4, %c0_5] : memref<1x32xf32, #tpu.memory_space<vmem>>, vector<1x32xf32>
    %cst_6 = arith.constant 9.99999974E-6 : f32
    %13 = vector.broadcast %cst_6 : f32 to vector<16x1xf32>
    %14 = arith.addf %11, %13 : vector<16x1xf32>
    %15 = math.rsqrt %14 : vector<16x1xf32>
    %16 = vector.broadcast %12 : vector<1x32xf32> to vector<16x32xf32>
    %17 = vector.broadcast %15 : vector<16x1xf32> to vector<16x32xf32>
    %18 = arith.mulf %16, %17 : vector<16x32xf32>
    %19 = arith.mulf %6, %18 : vector<16x32xf32>
    %c0_7 = arith.constant 0 : index
    %c0_8 = arith.constant 0 : index
    %20 = vector.load %arg3[%c0_7, %c0_8] : memref<1x32xf32, #tpu.memory_space<vmem>>, vector<1x32xf32>
    %21 = vector.broadcast %20 : vector<1x32xf32> to vector<16x32xf32>
    %22 = arith.addf %19, %21 : vector<16x32xf32>
    %c0_9 = arith.constant 0 : index
    %c0_10 = arith.constant 0 : index
    %23 = vector.load %arg4[%c0_9, %c0_10] : memref<32x192xf32, #tpu.memory_space<vmem>>, vector<32x192xf32>
    %cst_11 = arith.constant dense<0.000000e+00> : vector<16x192xf32>
    %24 = tpu.matmul %22, %23, %cst_11 {dimension_numbers = #tpu.dot_dimension_numbers<[1], [0], [0], [1], [0, 0, 1, 1], [], []>} : vector<16x32xf32>, vector<32x192xf32>, vector<16x192xf32> -> vector<16x192xf32>
    %c0_12 = arith.constant 0 : index
    %c0_13 = arith.constant 0 : index
    %25 = vector.load %arg5[%c0_12, %c0_13] : memref<16x192xf32, #tpu.memory_space<vmem>>, vector<16x192xf32>
    tpu.vector_store %arg5[%c0_12, %c0_13], %24 {strides = array<i32>} : memref<16x192xf32, #tpu.memory_space<vmem>>, vector<16x192xf32>,
    return
  }
  func.func @transform_0(%arg0: i32) -> (i32, i32) {
    %c0_i32 = arith.constant 0 : i32
    %c0_i32_0 = arith.constant 0 : i32
    return %arg0, %c0_i32 : i32, i32
  }
  func.func @transform_1(%arg0: i32) -> (i32, i32) {
    %c0_i32 = arith.constant 0 : i32
    %c0_i32_0 = arith.constant 0 : i32
    %c0_i32_1 = arith.constant 0 : i32
    return %c0_i32, %c0_i32_0 : i32, i32
  }
  func.func @transform_2(%arg0: i32) -> (i32, i32) {
    %c0_i32 = arith.constant 0 : i32
    %c0_i32_0 = arith.constant 0 : i32
    %c0_i32_1 = arith.constant 0 : i32
    return %c0_i32, %c0_i32_0 : i32, i32
  }
  func.func @transform_3(%arg0: i32) -> (i32, i32) {
    %c0_i32 = arith.constant 0 : i32
    %c0_i32_0 = arith.constant 0 : i32
    %c0_i32_1 = arith.constant 0 : i32
    return %c0_i32, %c0_i32_0 : i32, i32
  }
  func.func @transform_4(%arg0: i32) -> (i32, i32) {
    %c0_i32 = arith.constant 0 : i32
    %c0_i32_0 = arith.constant 0 : i32
    return %arg0, %c0_i32 : i32, i32
  }
}

</mosaic_0001>

<llo_original>
// kernel: tpu_custom_call.1
$region0: #{tpu_custom_call.1}
  #allocation0 [shape = 'u32[]', space=smem, size = 0x4, offset = 0x4, fixed_abs, tag = 'smem constant byte address 0x4 - core index']
  #allocation1 [shape = 'u32[72,128]{1,0:T(1,128)}', space=vmem, size = 0x9000, scoped, tag = 'internal scratch']
  %s0 = inlined_call_operand.hbm [shape: f32[16,32], index: 0, kind: input, shape index: {}]
  %s1 = inlined_call_operand.hbm [shape: f32[1,32], index: 1, kind: input, shape index: {}]
  %s2 = inlined_call_operand.vmem [shape: f32[1,32], index: 2, kind: input, shape index: {}]
  %s3 = inlined_call_operand.hbm [shape: f32[32,192], index: 3, kind: input, shape index: {}]
  %s4 = inlined_call_operand.hbm [shape: f32[16,192], index: 4, kind: output, shape index: {}]
  %s5 = sld [smem:[#allocation0]]
  $region38: #{tpu_custom_call.1} parent=0
    _
  %s7 = ssub.s32 1, %s5
  %s8 = scalar_select 0, %s7, %s5
  $region1: #{tpu_custom_call.1} parent=0
    #allocation2 [shape = 'u8[8192]{0}', space=vmem, size = 0x2000, scoped, tag = 'input window, operand 0, single buffered']
    #allocation3 [shape = 's32[1]{0}', space=sflag, size = 0x4, scoped, tag = 'scoped memory for tpu_custom_call.1']
    #allocation4 [shape = 's32[1]{0}', space=sflag, size = 0x4, scoped, tag = 'scoped memory for tpu_custom_call.1']
    #allocation5 [shape = 'u8[512]{0}', space=vmem, size = 0x400, scoped, tag = 'input window, operand 1, single buffered']
    #allocation6 [shape = 's32[1]{0}', space=sflag, size = 0x4, scoped, tag = 'scoped memory for tpu_custom_call.1']
    #allocation7 [shape = 'u8[32768]{0}', space=vmem, size = 0x8000, scoped, tag = 'input window, operand 3, single buffered']
    #allocation8 [shape = 'u8[16384]{0}', space=vmem, size = 0x4000, scoped, tag = 'output window, operand 0, single buffered']
    %9 = vsyncpa [#allocation3], 0
    %10 = vsyncpa [#allocation6], 0
    %11 = vsyncpa [#allocation4], 0
    // Predicated region
    $region2: #{tpu_custom_call.1} parent=1 // pred_check
      _
    $region3: #{tpu_custom_call.1} parent=1 // pred_check_branch
      %13 = sbr.rel (0) target = $region5
    $region4: #{tpu_custom_call.1} parent=1 // pred_region
      %15 = vsyncadd [#allocation3], 0
      %s16 = sshll.u32 %s0, 4
      %s17 = int_to_ptr.hbm [resolvable:$true] %s16
      %s18 = sshll.u32 [#allocation2], 4
      %s19 = int_to_ptr.vmem [resolvable:$true] %s18
      %24 = dma.hbm_to_vmem [thread:$0]  %s17, 256, %s19, [#allocation3], 128, 128, 8
    $region5: #{tpu_custom_call.1} parent=1 // pred_fallthru
      _
    // Predicated region
    $region6: #{tpu_custom_call.1} parent=1 // pred_check
      _
    $region7: #{tpu_custom_call.1} parent=1 // pred_check_branch
      %26 = sbr.rel (0) target = $region9
    $region8: #{tpu_custom_call.1} parent=1 // pred_region
      %28 = vsyncadd [#allocation6], 0
      %s30 = sshll.u32 %s1, 4
      %s31 = int_to_ptr.hbm [resolvable:$true] %s30
      %s32 = sshll.u32 [#allocation5], 4
      %s33 = int_to_ptr.vmem [resolvable:$true] %s32
      %35 = dma.hbm_to_vmem [thread:$0]  %s31, 16, %s33, [#allocation6]
    $region9: #{tpu_custom_call.1} parent=1 // pred_fallthru
      _
    // Predicated region
    $region10: #{tpu_custom_call.1} parent=1 // pred_check
      _
    $region11: #{tpu_custom_call.1} parent=1 // pred_check_branch
      %37 = sbr.rel (0) target = $region13
    $region12: #{tpu_custom_call.1} parent=1 // pred_region
      _
    $region13: #{tpu_custom_call.1} parent=1 // pred_fallthru
      _
    // Predicated region
    $region14: #{tpu_custom_call.1} parent=1 // pred_check
      _
    $region15: #{tpu_custom_call.1} parent=1 // pred_check_branch
      %39 = sbr.rel (0) target = $region17
    $region16: #{tpu_custom_call.1} parent=1 // pred_region
      %41 = vsyncadd [#allocation6], 0
      %s42 = sshll.u32 %s3, 4
      %s43 = int_to_ptr.hbm [resolvable:$true] %s42
      %s44 = sshll.u32 [#allocation7], 4
      %s45 = int_to_ptr.vmem [resolvable:$true] %s44
      %50 = dma.hbm_to_vmem [thread:$0]  %s43, 1024, %s45, [#allocation6], 256, 256, 16
    $region17: #{tpu_custom_call.1} parent=1 // pred_fallthru
      _
    // Predicated region
    $region18: #{tpu_custom_call.1} parent=1 // pred_check
      _
    $region19: #{tpu_custom_call.1} parent=1 // pred_check_branch
      %52 = sbr.rel (0) target = $region21
    $region20: #{tpu_custom_call.1} parent=1 // pred_region
      %54 = dma.done [#allocation3], 256
    $region21: #{tpu_custom_call.1} parent=1 // pred_fallthru
      _
    // Predicated region
    $region22: #{tpu_custom_call.1} parent=1 // pred_check
      _
    $region23: #{tpu_custom_call.1} parent=1 // pred_check_branch
      %56 = sbr.rel (0) target = $region25
    $region24: #{tpu_custom_call.1} parent=1 // pred_region
      %58 = dma.done [#allocation6], 16
    $region25: #{tpu_custom_call.1} parent=1 // pred_fallthru
      _
    // Predicated region
    $region26: #{tpu_custom_call.1} parent=1 // pred_check
      _
    $region27: #{tpu_custom_call.1} parent=1 // pred_check_branch
      %60 = sbr.rel (0) target = $region29
    $region28: #{tpu_custom_call.1} parent=1 // pred_region
      %62 = dma.done [#allocation6], 1024
    $region29: #{tpu_custom_call.1} parent=1 // pred_fallthru
      _
    %v63 = vld [vmem:[#allocation2] sm:$0xff]
    %v64 = vld [vmem:[#allocation2 + $0x8] sm:$0xff]
    %vm65 = vcmask 261120
    %v66 = vsel %vm65, %v63, 0.0
    %67 = vadd.xlane.f32.xlu0 %v66
    %v68 = vpop.xlane.xlu0 %67
    %v69 = vsel %vm65, %v64, 0.0
    %70 = vadd.xlane.f32.xlu0 %v69
    %v71 = vpop.xlane.xlu0 %70
    %v72 = vrcp.pop 32.0
    %v73 = vmul.f32 32.0, %v72
    %v74 = vsub.f32 1.0, %v73
    %v75 = vmul.f32 %v72, %v74
    %v76 = vadd.f32 %v72, %v75
    %vm77 = vweird.f32 %v72
    %v78 = vsel %vm77, %v72, %v76
    %v79 = vmul.f32 %v68, %v78
    %v80 = vmul.f32 %v71, %v78
    %v81 = vsub.f32 %v63, %v79
    %v82 = vsub.f32 %v64, %v80
    %v83 = vmul.f32 %v81, %v81
    %v84 = vmul.f32 %v82, %v82
    %v85 = vsel %vm65, %v83, 0.0
    %86 = vadd.xlane.f32.xlu0 %v85
    %v87 = vpop.xlane.xlu0 %86
    %v88 = vsel %vm65, %v84, 0.0
    %89 = vadd.xlane.f32.xlu0 %v88
    %v90 = vpop.xlane.xlu0 %89
    %v91 = vmul.f32 %v87, %v78
    %v92 = vmul.f32 %v90, %v78
    %v93 = vld [vmem:[#allocation5] sm:$0x1]
    %v94 = vadd.f32 %v91, 1e-05
    %v95 = vadd.f32 %v92, 1e-05
    %v96 = vrsqrt.pop %v94
    %v97 = vmul.f32 %v96, %v94
    %v98 = vmul.f32 %v97, %v96
    %v99 = vmul.f32 0.5, %v98
    %v100 = vsub.f32 1.5, %v99
    %v101 = vmul.f32 %v96, %v100
    %vm102 = vweird.f32 %v94
    %vm103 = vweird.f32 %v96
    %vm104 = vmor %vm102, %vm103
    %v105 = vsel %vm104, %v96, %v101
    %v106 = vrsqrt.pop %v95
    %v107 = vmul.f32 %v106, %v95
    %v108 = vmul.f32 %v107, %v106
    %v109 = vmul.f32 0.5, %v108
    %v110 = vsub.f32 1.5, %v109
    %v111 = vmul.f32 %v106, %v110
    %vm112 = vweird.f32 %v95
    %vm113 = vweird.f32 %v106
    %vm114 = vmor %vm112, %vm113
    %v115 = vsel %vm114, %v106, %v111
    %v117 = vperm.slane %v93, 0
    %v119 = vmul.f32 %v117, %v105
    %v120 = vmul.f32 %v117, %v115
    %v121 = vmul.f32 %v81, %v119
    %v122 = vmul.f32 %v82, %v120
    %v123 = vld [vmem:[%s2] sm:$0x1]
    %v125 = vperm.slane %v123, 0
    %v127 = vadd.f32 %v121, %v125
    %v128 = vadd.f32 %v122, %v125
    %v129 = vld [vmem:[#allocation7] sm:$0xff]
    %v130 = vld [vmem:[#allocation7 + $0x8] sm:$0xff]
    %v131 = vld [vmem:[#allocation7 + $0x10] sm:$0xff]
    %v132 = vld [vmem:[#allocation7 + $0x18] sm:$0xff]
    %v133 = vld [vmem:[#allocation7 + $0x20] sm:$0xff]
    %v134 = vld [vmem:[#allocation7 + $0x28] sm:$0xff]
    %v135 = vld [vmem:[#allocation7 + $0x30] sm:$0xff]
    %v136 = vld [vmem:[#allocation7 + $0x38] sm:$0xff]
    %v138 = vsel %vm65, %v127, 0
    %v141 = vsel %vm65, %v128, 0
    %143 = vmatpush.msra.mxu0 0.0
    %144 = vmatpush.msra.mxu0 0.0
    %145 = vmatpush.msra.mxu0 0.0
    %146 = vmatpush.msra.mxu0 0.0
    %147 = vmatpush.msra.mxu0 0.0
    %148 = vmatpush.msra.mxu0 0.0
    %149 = vmatpush.msra.mxu0 0.0
    %150 = vmatpush.msra.mxu0 0.0
    %151 = vmatpush.msra.mxu0 0.0
    %152 = vmatpush.msra.mxu0 0.0
    %153 = vmatpush.msra.mxu0 0.0
    %154 = vmatpush.msra.mxu0 0.0
    %155 = vmatpush.msra.mxu0 %v135
    %156 = vmatpush.msra.mxu0 %v133
    %157 = vmatpush.msra.mxu0 %v131
    %158 = vmatpush.msra.mxu0 %v129
    %159 = vmatmul.f32.gmra.mxu0 %v138
    %v160 = vpop.f32.mrf.mxu0
    %v161 = vadd.f32 0.0, %v160
    %162 = vmatmul.f32.gmra.mxu0 %v141
    %v163 = vpop.f32.mrf.mxu0
    %v164 = vadd.f32 0.0, %v163
    %165 = vdwg.mxu0
    %166 = vmatpush.msra.mxu0 0.0
    %167 = vmatpush.msra.mxu0 0.0
    %168 = vmatpush.msra.mxu0 0.0
    %169 = vmatpush.msra.mxu0 0.0
    %170 = vmatpush.msra.mxu0 0.0
    %171 = vmatpush.msra.mxu0 0.0
    %172 = vmatpush.msra.mxu0 0.0
    %173 = vmatpush.msra.mxu0 0.0
    %174 = vmatpush.msra.mxu0 0.0
    %175 = vmatpush.msra.mxu0 0.0
    %176 = vmatpush.msra.mxu0 0.0
    %177 = vmatpush.msra.mxu0 0.0
    %178 = vmatpush.msra.mxu0 %v136
    %179 = vmatpush.msra.mxu0 %v134
    %180 = vmatpush.msra.mxu0 %v132
    %181 = vmatpush.msra.mxu0 %v130
    %182 = vmatmul.f32.gmra.mxu0 %v138
    %v183 = vpop.f32.mrf.mxu0
    %v184 = vadd.f32 0.0, %v183
    %185 = vmatmul.f32.gmra.mxu0 %v141
    %v186 = vpop.f32.mrf.mxu0
    %v187 = vadd.f32 0.0, %v186
    %188 = vdwg.mxu0
    %189 = vst [vmem:[#allocation8] sm:$0xff] %v161
    %vm190 = vcmask 523264
    %191 = vst.msk [vmem:[#allocation8 + $0x8] sm:$0xff] %vm190, %v184
    %192 = vst [vmem:[#allocation8 + $0x10] sm:$0xff] %v164
    %193 = vst.msk [vmem:[#allocation8 + $0x18] sm:$0xff] %vm190, %v187
    // Predicated region
    $region30: #{tpu_custom_call.1} parent=1 // pred_check
      _
    $region31: #{tpu_custom_call.1} parent=1 // pred_check_branch
      %195 = sbr.rel (0) target = $region33
    $region32: #{tpu_custom_call.1} parent=1 // pred_region
      %197 = vsyncadd [#allocation4], 0
      %s198 = sshll.u32 [#allocation8], 4
      %s199 = int_to_ptr.vmem [resolvable:$true] %s198
      %s200 = sshll.u32 %s4, 4
      %s201 = int_to_ptr.hbm [resolvable:$true] %s200
      %206 = dma.vmem_to_hbm [thread:$0]  %s199, 512, %s201, [#allocation4], 256, 256, 16
    $region33: #{tpu_custom_call.1} parent=1 // pred_fallthru
      _
    // Predicated region
    $region34: #{tpu_custom_call.1} parent=1 // pred_check
      _
    $region35: #{tpu_custom_call.1} parent=1 // pred_check_branch
      %208 = sbr.rel (0) target = $region37
    $region36: #{tpu_custom_call.1} parent=1 // pred_region
      %210 = dma.done [#allocation4], 512
    $region37: #{tpu_custom_call.1} parent=1 // pred_fallthru
      _
    %211 = vsyncpa [#allocation3], 1
    %212 = vsyncpa [#allocation6], 1
    %213 = vsyncpa [#allocation4], 1

</llo_original>
